<compile_context>
chip_gen: v6e
topology: v6e:2x2x1
jax: 0.10.0
libtpu: 0.0.40
codegen_flags: <defaults>
</compile_context>

<pallas_src>
import jax
import jax.numpy as jnp
import numpy as np
from jax.experimental import pallas as pl
from jax.experimental.pallas import tpu as pltpu

NUM_ADDED = 2                       # EgoEncoder.num_added
_SUBLANE = 8                        # f32 sublane tile
_TM_MAX = 2048                      # row-tile ceiling
_TILE_VMEM_BUDGET = 20 * 1024 * 1024
_VMEM_CAP_BYTES = 40 * 1024 * 1024  # stay under v7x's 64 MiB physical VMEM


def _round_up(x, m):
    return -(-x // m) * m


def _ego_encoder_kernel(x_ref, w_ref, b_ref, o_ref):
    """Fused hstack(x[:, :2], x[:, 2:] @ W.T + b) on one row tile.

    x_ref : [TM, 2 + D_IN]         row tile of x (pipelined)
    w_ref : [2 + D_IN, 2 + D_OUT]  resident: [[I2, 0], [0, W.T]]
    b_ref : [1, 2 + D_OUT]         resident: [0, 0, b...]  (f32)
    o_ref : [TM, 2 + D_OUT]        row tile of the output (pipelined)
    """
    xb = x_ref[...]
    acc = jnp.dot(xb.astype(w_ref.dtype), w_ref[...],
                  preferred_element_type=jnp.float32)           # MXU, f32 accumulate
    o_ref[...] = (acc + b_ref[...]).astype(o_ref.dtype)
    # Exact passthrough of the first two columns (aligned 2-lane masked store;
    # the store slot has plenty of slack on this HBM-bound kernel).
    o_ref[:, :NUM_ADDED] = xb[:, :NUM_ADDED].astype(o_ref.dtype)


def prepare_encoder_params(w, b, *, num_added=NUM_ADDED, compute_dtype=jnp.float32):
    """Hoisted once per model: embed the hstack into the matmul.

      W' = [[I_num_added, 0  ],
            [0,           W.T]]        shape [num_added + D_IN, num_added + D_OUT]
      b' = [0]*num_added ++ b          shape [1, num_added + D_OUT]   (f32)

    Pass compute_dtype=jnp.bfloat16 to halve the resident-weight bytes and the
    MXU pass count when the accuracy budget allows (accumulation stays f32).
    """
    w = jnp.asarray(w)
    b = jnp.asarray(b)
    d_out, d_in = w.shape
    w_emb = jnp.zeros((num_added + d_in, num_added + d_out), dtype=compute_dtype)
    w_emb = w_emb.at[:num_added, :num_added].set(jnp.eye(num_added, dtype=compute_dtype))
    w_emb = w_emb.at[num_added:, num_added:].set(w.T.astype(compute_dtype))
    b_emb = jnp.zeros((1, num_added + d_out), dtype=jnp.float32)
    b_emb = b_emb.at[0, num_added:].set(b.astype(jnp.float32))
    return w_emb, b_emb


def _choose_row_tile(n, row_bytes):
    """Largest VMEM-friendly row tile; keep >=2 grid steps (v7x has 2 TCs)
    whenever the problem is large enough to split."""
    tm_cap = (_TILE_VMEM_BUDGET // max(row_bytes, 1)) // _SUBLANE * _SUBLANE
    tm_cap = max(_SUBLANE, min(_TM_MAX, tm_cap))
    if n <= 2 * _SUBLANE:
        return _round_up(max(n, 1), _SUBLANE)
    half = _round_up(-(-n // 2), _SUBLANE)          # split rows across 2 TensorCores
    return max(_SUBLANE, min(tm_cap, half))


def ego_encoder(x, w_emb, b_emb, *, out_dtype=None, tm=None):
    """forward(x) = hstack(x[:, :2], x[:, 2:] @ W.T + b), fully fused.

    x     : [N, 2 + D_IN]
    w_emb : [2 + D_IN, 2 + D_OUT]   (from prepare_encoder_params)
    b_emb : [1, 2 + D_OUT]          (f32, from prepare_encoder_params)
    """
    n, d_in_total = x.shape
    d_out_total = w_emb.shape[1]
    assert w_emb.shape[0] == d_in_total, (
        "w_emb must be built with prepare_encoder_params for this input width")
    out_dtype = x.dtype if out_dtype is None else jnp.dtype(out_dtype)

    x_bytes = jnp.dtype(x.dtype).itemsize
    o_bytes = jnp.dtype(out_dtype).itemsize
    # Double-buffered input + output tile bytes, per row.
    row_bytes = 2 * d_in_total * x_bytes + 2 * d_out_total * o_bytes
    if tm is None:
        tm = _choose_row_tile(n, row_bytes)
    grid = (pl.cdiv(n, tm),)  # non-divisible N handled by Pallas edge blocks

    # Tile-derived VMEM sizing with headroom, capped below v7x's 64 MiB.
    w_bytes = w_emb.size * jnp.dtype(w_emb.dtype).itemsize
    b_bytes = b_emb.size * jnp.dtype(b_emb.dtype).itemsize
    vmem_needed = tm * row_bytes + 2 * (w_bytes + b_bytes)
    vmem_limit = int(min(_VMEM_CAP_BYTES,
                         max(16 * 1024 * 1024, 2 * vmem_needed + (4 << 20))))

    return pl.pallas_call(
        _ego_encoder_kernel,
        out_shape=jax.ShapeDtypeStruct((n, d_out_total), out_dtype),
        grid_spec=pltpu.PrefetchScalarGridSpec(
            num_scalar_prefetch=0,
            grid=grid,
            in_specs=[
                pl.BlockSpec((tm, d_in_total), lambda i: (i, 0)),           # x row tile
                pl.BlockSpec((d_in_total, d_out_total), lambda i: (0, 0)),  # W' resident
                pl.BlockSpec((1, d_out_total), lambda i: (0, 0)),           # b' resident
            ],
            out_specs=pl.BlockSpec((tm, d_out_total), lambda i: (i, 0)),
        ),
        compiler_params=pltpu.CompilerParams(
            dimension_semantics=("parallel",),   # row tiles shard across TCs (v7x)
            vmem_limit_bytes=vmem_limit,
        ),
    )(x, w_emb, b_emb)


if __name__ == "__main__":
    key = jax.random.PRNGKey(0)
    kx, kw, kb = jax.random.split(key, 3)

    # Small but tile-able shapes: 256 rows -> 2 row tiles of 128 (grid >= 2),
    # feature dims one 128-lane vreg wide.
    N, D_IN, D_OUT = 256, 128, 128

    x = jax.random.normal(kx, (N, NUM_ADDED + D_IN), dtype=jnp.float32)
    bound = 1.0 / np.sqrt(D_IN)  # PyTorch Linear default init style
    w = jax.random.uniform(kw, (D_OUT, D_IN), dtype=jnp.float32,
                           minval=-bound, maxval=bound)
    b = jax.random.uniform(kb, (D_OUT,), dtype=jnp.float32,
                           minval=-bound, maxval=bound)

    # float64 numpy reference with the original PyTorch semantics.
    xs = np.asarray(x, dtype=np.float64)
    ws = np.asarray(w, dtype=np.float64)
    bs = np.asarray(b, dtype=np.float64)
    ref = np.concatenate([xs[:, :NUM_ADDED], xs[:, NUM_ADDED:] @ ws.T + bs], axis=1)

    fwd = jax.jit(ego_encoder)

    # f32 compute path (tight check).
    w32, b32 = prepare_encoder_params(w, b, compute_dtype=jnp.float32)
    out32 = jax.block_until_ready(fwd(x, w32, b32))
    assert out32.shape == (N, NUM_ADDED + D_OUT)
    np.testing.assert_allclose(np.asarray(out32, dtype=np.float64), ref,
                               atol=2e-3, rtol=2e-3)
    np.testing.assert_array_equal(np.asarray(out32[:, :NUM_ADDED]),
                                  np.asarray(x[:, :NUM_ADDED]))  # exact passthrough

    # bf16 MXU-operand path (f32 accumulate, f32 output); compare against a
    # reference that applies the same bf16 rounding to the operands.
    wbf, bbf = prepare_encoder_params(w, b, compute_dtype=jnp.bfloat16)
    outbf = jax.block_until_ready(fwd(x, wbf, bbf))
    x_bf = np.asarray(x[:, NUM_ADDED:].astype(jnp.bfloat16).astype(jnp.float64))
    w_bf = np.asarray(jnp.asarray(w).astype(jnp.bfloat16).astype(jnp.float64))
    ref_bf = np.concatenate([xs[:, :NUM_ADDED], x_bf @ w_bf.T + bs], axis=1)
    np.testing.assert_allclose(np.asarray(outbf, dtype=np.float64), ref_bf,
                               atol=2e-3, rtol=2e-3)
    np.testing.assert_array_equal(np.asarray(outbf[:, :NUM_ADDED]),
                                  np.asarray(x[:, :NUM_ADDED]))  # exact passthrough

    print("KERNEL_OK")
</pallas_src>

<mosaic_0001>
module attributes {stable_mosaic.version = 11 : i64} {
  func.func @_ego_encoder_kernel(%arg0: i32, %arg1: memref<128x130xf32, #tpu.memory_space<vmem>>, %arg2: memref<130x130xf32, #tpu.memory_space<vmem>>, %arg3: memref<1x130xf32, #tpu.memory_space<vmem>>, %arg4: memref<128x130xf32, #tpu.memory_space<vmem>>) attributes {dimension_semantics = [#tpu.dimension_semantics<parallel>], iteration_bounds = array<i64: 2>, scalar_prefetch = 0 : i64, scratch_operands = 0 : i64, tpu.core_type = #tpu.core_type<tc>, window_params = [{transform_indices = @transform_0, window_bounds = array<i64: 128, 130>}, {pipeline_mode = #tpu.pipeline_mode<synchronous>, transform_indices = @transform_1, window_bounds = array<i64: 130, 130>}, {pipeline_mode = #tpu.pipeline_mode<synchronous>, transform_indices = @transform_2, window_bounds = array<i64: 1, 130>}, {transform_indices = @transform_3, window_bounds = array<i64: 128, 130>}]} {
    %c0 = arith.constant 0 : index
    %c0_0 = arith.constant 0 : index
    %0 = vector.load %arg1[%c0, %c0_0] : memref<128x130xf32, #tpu.memory_space<vmem>>, vector<128x130xf32>
    %c0_1 = arith.constant 0 : index
    %c0_2 = arith.constant 0 : index
    %1 = vector.load %arg2[%c0_1, %c0_2] : memref<130x130xf32, #tpu.memory_space<vmem>>, vector<130x130xf32>
    %cst = arith.constant dense<0.000000e+00> : vector<128x130xf32>
    %2 = tpu.matmul %0, %1, %cst {dimension_numbers = #tpu.dot_dimension_numbers<[1], [0], [0], [1], [0, 0, 1, 1], [], []>} : vector<128x130xf32>, vector<130x130xf32>, vector<128x130xf32> -> vector<128x130xf32>
    %c0_3 = arith.constant 0 : index
    %c0_4 = arith.constant 0 : index
    %3 = vector.load %arg3[%c0_3, %c0_4] : memref<1x130xf32, #tpu.memory_space<vmem>>, vector<1x130xf32>
    %4 = vector.broadcast %3 : vector<1x130xf32> to vector<128x130xf32>
    %5 = arith.addf %2, %4 : vector<128x130xf32>
    %c0_5 = arith.constant 0 : index
    %c0_6 = arith.constant 0 : index
    %6 = vector.load %arg4[%c0_5, %c0_6] : memref<128x130xf32, #tpu.memory_space<vmem>>, vector<128x130xf32>
    tpu.vector_store %arg4[%c0_5, %c0_6], %5 {strides = array<i32>} : memref<128x130xf32, #tpu.memory_space<vmem>>, vector<128x130xf32>,
    %7 = vector.extract_strided_slice %0 {offsets = [0, 0], sizes = [128, 2], strides = [1, 1]} : vector<128x130xf32> to vector<128x2xf32>
    %c0_7 = arith.constant 0 : index
    %c0_8 = arith.constant 0 : index
    %8 = vector.load %arg4[%c0_7, %c0_8] : memref<128x130xf32, #tpu.memory_space<vmem>>, vector<128x2xf32>
    tpu.vector_store %arg4[%c0_7, %c0_8], %7 {strides = array<i32>} : memref<128x130xf32, #tpu.memory_space<vmem>>, vector<128x2xf32>,
    return
  }
  func.func @transform_0(%arg0: i32) -> (i32, i32) {
    %c0_i32 = arith.constant 0 : i32
    %c0_i32_0 = arith.constant 0 : i32
    return %arg0, %c0_i32 : i32, i32
  }
  func.func @transform_1(%arg0: i32) -> (i32, i32) {
    %c0_i32 = arith.constant 0 : i32
    %c0_i32_0 = arith.constant 0 : i32
    %c0_i32_1 = arith.constant 0 : i32
    return %c0_i32, %c0_i32_0 : i32, i32
  }
  func.func @transform_2(%arg0: i32) -> (i32, i32) {
    %c0_i32 = arith.constant 0 : i32
    %c0_i32_0 = arith.constant 0 : i32
    %c0_i32_1 = arith.constant 0 : i32
    return %c0_i32, %c0_i32_0 : i32, i32
  }
  func.func @transform_3(%arg0: i32) -> (i32, i32) {
    %c0_i32 = arith.constant 0 : i32
    %c0_i32_0 = arith.constant 0 : i32
    return %arg0, %c0_i32 : i32, i32
  }
}

</mosaic_0001>

<llo_original>
// kernel: ego_encoder.1
$region0: #{ego_encoder.1}
  #allocation0 [shape = 'u32[]', space=smem, size = 0x4, offset = 0x4, fixed_abs, tag = 'smem constant byte address 0x4 - core index']
  #allocation1 [shape = 'u32[144,128]{1,0:T(1,128)}', space=vmem, size = 0x12000, scoped, tag = 'internal scratch']
  %s0 = inlined_call_operand.vmem [shape: f32[256,130], index: 0, kind: input, shape index: {}]
  %s1 = inlined_call_operand.vmem [shape: f32[130,130], index: 1, kind: input, shape index: {}]
  %s2 = inlined_call_operand.vmem [shape: f32[1,130], index: 2, kind: input, shape index: {}]
  %s3 = inlined_call_operand.vmem [shape: f32[256,130], index: 3, kind: output, shape index: {}]
  %s4 = sld [smem:[#allocation0]]
  $region45: #{ego_encoder.1} parent=0
    _
  %s6 = ssub.s32 1, %s4
  %s7 = scalar_select 0, %s6, %s4
  loop: start=0, step=1, limit=4
  $region2: #{ego_encoder.1} parent=0 // loop_pre_header
    _
  $region3: #{ego_encoder.1} parent=0 // loop_header
    %s9 = sphi 0, %s13
    %p10 = scmp.ge.s32.totalorder %s9, 4
    %s19 = sphi 0, %s21
    %s22 = sphi 0, %s19
    %s23 = sphi 0, %s22
    %s39 = sphi 0, %s23
    %s43 = sphi 0, %s43
    %s45 = sphi 0, %s43
    %s46 = sphi 0, %s45
    %s60 = sphi 0, %s46
    %s64 = sphi 0, %s64
    %s66 = sphi 0, %s64
    %s67 = sphi 0, %s66
    %s81 = sphi 0, %s67
    %s87 = sphi 0, %s89
    %s90 = sphi 0, %s87
    %s91 = sphi 0, %s90
    %s107 = sphi 0, %s91
  $region4: #{ego_encoder.1} parent=0 // loop_header_branch
    %12 = sbr.rel (%p10) target = $region8
  $region5: #{ego_encoder.1} parent=0 // loop_body
    %s14 = ssub.s32 %s9, 1
    %s15 = ssub.s32 %s9, 2
    %s16 = sadd.s32 %s9, 1
    %s17 = ssub.s32 %s9, %s16
    %p18 = scmp.eq.s32.totalorder %s17, 0
    %s20 = sadd.s32 %s19, 1
    %s21 = scalar_select %p18, %s19, %s20
    %p24 = pneg %p18
    %p25 = scmp.eq.s32.totalorder %s9, 1
    %p26 = por %p24, %p25
    %p27 = scmp.ne.s32.totalorder %s19, %s22
    %p28 = scmp.eq.s32.totalorder %s9, 0
    %p29 = por %p27, %p28
    %p30 = scmp.ne.s32.totalorder %s19, %s22
    %p31 = scmp.eq.s32.totalorder %s14, 1
    %p32 = por %p30, %p31
    %p33 = scmp.ne.s32.totalorder %s22, %s23
    %p34 = scmp.eq.s32.totalorder %s14, 0
    %p35 = por %p33, %p34
    %p36 = scmp.ne.s32.totalorder %s22, %s23
    %p37 = scmp.eq.s32.totalorder %s15, 1
    %p38 = por %p36, %p37
    %p40 = scmp.ne.s32.totalorder %s23, %s39
    %p41 = scmp.eq.s32.totalorder %s15, 0
    %p42 = por %p40, %p41
    %s44 = sadd.s32 %s43, 1
    %p47 = scmp.eq.s32.totalorder %s9, 1
    %p48 = scmp.ne.s32.totalorder %s43, %s45
    %p49 = scmp.eq.s32.totalorder %s9, 0
    %p50 = por %p48, %p49
    %p51 = scmp.ne.s32.totalorder %s43, %s45
    %p52 = scmp.eq.s32.totalorder %s14, 1
    %p53 = por %p51, %p52
    %p54 = scmp.ne.s32.totalorder %s45, %s46
    %p55 = scmp.eq.s32.totalorder %s14, 0
    %p56 = por %p54, %p55
    %p57 = scmp.ne.s32.totalorder %s45, %s46
    %p58 = scmp.eq.s32.totalorder %s15, 1
    %p59 = por %p57, %p58
    %p61 = scmp.ne.s32.totalorder %s46, %s60
    %p62 = scmp.eq.s32.totalorder %s15, 0
    %p63 = por %p61, %p62
    %s65 = sadd.s32 %s64, 1
    %p68 = scmp.eq.s32.totalorder %s9, 1
    %p69 = scmp.ne.s32.totalorder %s64, %s66
    %p70 = scmp.eq.s32.totalorder %s9, 0
    %p71 = por %p69, %p70
    %p72 = scmp.ne.s32.totalorder %s64, %s66
    %p73 = scmp.eq.s32.totalorder %s14, 1
    %p74 = por %p72, %p73
    %p75 = scmp.ne.s32.totalorder %s66, %s67
    %p76 = scmp.eq.s32.totalorder %s14, 0
    %p77 = por %p75, %p76
    %p78 = scmp.ne.s32.totalorder %s66, %s67
    %p79 = scmp.eq.s32.totalorder %s15, 1
    %p80 = por %p78, %p79
    %p82 = scmp.ne.s32.totalorder %s67, %s81
    %p83 = scmp.eq.s32.totalorder %s15, 0
    %p84 = por %p82, %p83
    %s85 = ssub.s32 %s9, %s16
    %p86 = scmp.eq.s32.totalorder %s85, 0
    %s88 = sadd.s32 %s87, 1
    %s89 = scalar_select %p86, %s87, %s88
    %p92 = pneg %p86
    %p93 = scmp.eq.s32.totalorder %s9, 1
    %p94 = por %p92, %p93
    %p95 = scmp.ne.s32.totalorder %s87, %s90
    %p96 = scmp.eq.s32.totalorder %s9, 0
    %p97 = por %p95, %p96
    %p98 = scmp.ne.s32.totalorder %s87, %s90
    %p99 = scmp.eq.s32.totalorder %s14, 1
    %p100 = por %p98, %p99
    %p101 = scmp.ne.s32.totalorder %s90, %s91
    %p102 = scmp.eq.s32.totalorder %s14, 0
    %p103 = por %p101, %p102
    %p104 = scmp.ne.s32.totalorder %s90, %s91
    %p105 = scmp.eq.s32.totalorder %s15, 1
    %p106 = por %p104, %p105
    %p108 = scmp.ne.s32.totalorder %s91, %s107
    %p109 = scmp.eq.s32.totalorder %s15, 0
    %p110 = por %p108, %p109
    %p111 = scmp.le.s32.totalorder 1, %s9
    %p112 = scmp.lt.s32.totalorder %s9, 3
    %p113 = pnand %p111, %p112
    %p114 = pneg %p113
    // Predicated region
    $region9: #{ego_encoder.1} parent=5 // pred_check
      _
    $region10: #{ego_encoder.1} parent=5 // pred_check_branch
      %116 = sbr.rel (%p113) target = $region12
    $region11: #{ego_encoder.1} parent=5 // pred_region
      %s117 = ssub.s32 %s9, 1
      // Predicated region
      $region13: #{ego_encoder.1} parent=11 // pred_check
        %p118 = pneg %p56
      $region14: #{ego_encoder.1} parent=11 // pred_check_branch
        %120 = sbr.rel (%p118) target = $region16
      $region15: #{ego_encoder.1} parent=11 // pred_region
        _
      $region16: #{ego_encoder.1} parent=11 // pred_fallthru
        _
      // Predicated region
      $region17: #{ego_encoder.1} parent=11 // pred_check
        %p121 = pneg %p77
      $region18: #{ego_encoder.1} parent=11 // pred_check_branch
        %123 = sbr.rel (%p121) target = $region20
      $region19: #{ego_encoder.1} parent=11 // pred_region
        _
      $region20: #{ego_encoder.1} parent=11 // pred_fallthru
        _
    $region12: #{ego_encoder.1} parent=5 // pred_fallthru
      _
    %p124 = scmp.lt.s32.totalorder %s9, 2
    // Predicated region
    $region21: #{ego_encoder.1} parent=5 // pred_check
      %p125 = pneg %p124
    $region22: #{ego_encoder.1} parent=5 // pred_check_branch
      %127 = sbr.rel (%p125) target = $region24
    $region23: #{ego_encoder.1} parent=5 // pred_region
      // Predicated region
      $region25: #{ego_encoder.1} parent=23 // pred_check
        %p128 = pneg %p29
      $region26: #{ego_encoder.1} parent=23 // pred_check_branch
        %130 = sbr.rel (%p128) target = $region28
      $region27: #{ego_encoder.1} parent=23 // pred_region
        %s131 = smul.u32 16, %s9
        %p132 = scmp.lt.s32.totalorder %s131, 31
        %s133 = scalar_select %p132, %s131, 31
        %s134 = smul.addr %s133, 2
        %s135 = smul.addr %s134, 8
        %s136 = scalar_lea.vmem %s0, %s135
        %s137 = smul.u32 16, %s9
      $region28: #{ego_encoder.1} parent=23 // pred_fallthru
        _
    $region24: #{ego_encoder.1} parent=5 // pred_fallthru
      _
    %p138 = scmp.le.s32.totalorder 1, %s9
    %p139 = scmp.lt.s32.totalorder %s9, 3
    %p140 = pnand %p138, %p139
    %p141 = pneg %p140
    // Predicated region
    $region29: #{ego_encoder.1} parent=5 // pred_check
      _
    $region30: #{ego_encoder.1} parent=5 // pred_check_branch
      %143 = sbr.rel (%p140) target = $region32
    $region31: #{ego_encoder.1} parent=5 // pred_region
      %s144 = ssub.s32 %s9, 1
      %s145 = smul.u32 16, %s14
      %p146 = scmp.lt.s32.totalorder %s145, 31
      %s147 = scalar_select %p146, %s145, 31
      %s148 = smul.addr %s147, 2
      %s149 = smul.addr %s148, 8
      %s150 = scalar_lea.vmem %s0, %s149
      %p151 = pneg %p35
      %p152 = pneg %p32
      %p153 = pneg %p56
      %p154 = pneg %p53
      %p155 = pneg %p77
      %p156 = pneg %p74
      %p157 = pneg %p103
      %p158 = pneg %p100
      %s159 = smul.u32 16, %s14
      %p160 = scmp.lt.s32.totalorder %s159, 31
      %s161 = scalar_select %p160, %s159, 31
      %s162 = smul.addr %s161, 2
      %s163 = smul.addr %s162, 8
      %s164 = scalar_lea.vmem %s3, %s163
      %s165 = smul.u32 16, %s14
      %p166 = scmp.lt.s32.totalorder %s165, 31
      %s167 = scalar_select %p166, %s165, 31
      %s168 = smul.addr %s167, 2
      %s169 = smul.addr %s168, 8
      %s170 = scalar_lea.vmem %s0, %s169
      %s171 = smul.u32 16, %s14
      %s172 = smul.u32 16, %s14
      %p173 = scmp.lt.s32.totalorder %s172, 31
      %s174 = scalar_select %p173, %s172, 31
      %s175 = smul.addr %s174, 2
      %s176 = smul.addr %s175, 8
      %s177 = scalar_lea.vmem %s3, %s176
      %s178 = smul.u32 16, %s14
      %v179 = vld [vmem:[%s170] sm:$0xff]
      %v180 = vld [vmem:[%s170 + $0x8] sm:$0xff]
      %v181 = vld [vmem:[%s170 + $0x10] sm:$0xff]
      %v182 = vld [vmem:[%s170 + $0x18] sm:$0xff]
      %v183 = vld [vmem:[%s170 + $0x20] sm:$0xff]
      %v184 = vld [vmem:[%s170 + $0x28] sm:$0xff]
      %v185 = vld [vmem:[%s170 + $0x30] sm:$0xff]
      %v186 = vld [vmem:[%s170 + $0x38] sm:$0xff]
      %v187 = vld [vmem:[%s170 + $0x40] sm:$0xff]
      %v188 = vld [vmem:[%s170 + $0x48] sm:$0xff]
      %v189 = vld [vmem:[%s170 + $0x50] sm:$0xff]
      %v190 = vld [vmem:[%s170 + $0x58] sm:$0xff]
      %v191 = vld [vmem:[%s170 + $0x60] sm:$0xff]
      %v192 = vld [vmem:[%s170 + $0x68] sm:$0xff]
      %v193 = vld [vmem:[%s170 + $0x70] sm:$0xff]
      %v194 = vld [vmem:[%s170 + $0x78] sm:$0xff]
      %v195 = vld [vmem:[%s170 + $0x80] sm:$0xff]
      %v196 = vld [vmem:[%s170 + $0x88] sm:$0xff]
      %v197 = vld [vmem:[%s170 + $0x90] sm:$0xff]
      %v198 = vld [vmem:[%s170 + $0x98] sm:$0xff]
      %v199 = vld [vmem:[%s170 + $0xa0] sm:$0xff]
      %v200 = vld [vmem:[%s170 + $0xa8] sm:$0xff]
      %v201 = vld [vmem:[%s170 + $0xb0] sm:$0xff]
      %v202 = vld [vmem:[%s170 + $0xb8] sm:$0xff]
      %v203 = vld [vmem:[%s170 + $0xc0] sm:$0xff]
      %v204 = vld [vmem:[%s170 + $0xc8] sm:$0xff]
      %v205 = vld [vmem:[%s170 + $0xd0] sm:$0xff]
      %v206 = vld [vmem:[%s170 + $0xd8] sm:$0xff]
      %v207 = vld [vmem:[%s170 + $0xe0] sm:$0xff]
      %v208 = vld [vmem:[%s170 + $0xe8] sm:$0xff]
      %v209 = vld [vmem:[%s170 + $0xf0] sm:$0xff]
      %v210 = vld [vmem:[%s170 + $0xf8] sm:$0xff]
      %v211 = vld [vmem:[%s1] sm:$0xff]
      %v212 = vld [vmem:[%s1 + $0x8] sm:$0xff]
      %v213 = vld [vmem:[%s1 + $0x10] sm:$0xff]
      %v214 = vld [vmem:[%s1 + $0x18] sm:$0xff]
      %v215 = vld [vmem:[%s1 + $0x20] sm:$0xff]
      %v216 = vld [vmem:[%s1 + $0x28] sm:$0xff]
      %v217 = vld [vmem:[%s1 + $0x30] sm:$0xff]
      %v218 = vld [vmem:[%s1 + $0x38] sm:$0xff]
      %v219 = vld [vmem:[%s1 + $0x40] sm:$0xff]
      %v220 = vld [vmem:[%s1 + $0x48] sm:$0xff]
      %v221 = vld [vmem:[%s1 + $0x50] sm:$0xff]
      %v222 = vld [vmem:[%s1 + $0x58] sm:$0xff]
      %v223 = vld [vmem:[%s1 + $0x60] sm:$0xff]
      %v224 = vld [vmem:[%s1 + $0x68] sm:$0xff]
      %v225 = vld [vmem:[%s1 + $0x70] sm:$0xff]
      %v226 = vld [vmem:[%s1 + $0x78] sm:$0xff]
      %v227 = vld [vmem:[%s1 + $0x80] sm:$0xff]
      %v228 = vld [vmem:[%s1 + $0x88] sm:$0xff]
      %v229 = vld [vmem:[%s1 + $0x90] sm:$0xff]
      %v230 = vld [vmem:[%s1 + $0x98] sm:$0xff]
      %v231 = vld [vmem:[%s1 + $0xa0] sm:$0xff]
      %v232 = vld [vmem:[%s1 + $0xa8] sm:$0xff]
      %v233 = vld [vmem:[%s1 + $0xb0] sm:$0xff]
      %v234 = vld [vmem:[%s1 + $0xb8] sm:$0xff]
      %v235 = vld [vmem:[%s1 + $0xc0] sm:$0xff]
      %v236 = vld [vmem:[%s1 + $0xc8] sm:$0xff]
      %v237 = vld [vmem:[%s1 + $0xd0] sm:$0xff]
      %v238 = vld [vmem:[%s1 + $0xd8] sm:$0xff]
      %v239 = vld [vmem:[%s1 + $0xe0] sm:$0xff]
      %v240 = vld [vmem:[%s1 + $0xe8] sm:$0xff]
      %v241 = vld [vmem:[%s1 + $0xf0] sm:$0xff]
      %v242 = vld [vmem:[%s1 + $0xf8] sm:$0xff]
      %v243 = vld [vmem:[%s1 + $0x100] sm:$0x3]
      %v244 = vld [vmem:[%s1 + $0x108] sm:$0x3]
      %v245 = vld [vmem:[%s2] sm:$0x3]
      %v247 = vlaneseq
      %v248 = vshrl.u32 %v247, 7
      %v249 = vsub.s32 0, %v248
      %v250 = vrot.slane %v245, %v249
      %v251 = vlaneseq
      %v252 = vshrl.u32 %v251, 7
      %v253 = vsub.s32 1, %v252
      %v254 = vrot.slane %v245, %v253
      %vm257 = vcmask 15360
      %v259 = vsel %vm257, %v180, 0
      %v262 = vsel %vm257, %v182, 0
      %v265 = vsel %vm257, %v184, 0
      %v268 = vsel %vm257, %v186, 0
      %v271 = vsel %vm257, %v188, 0
      %v274 = vsel %vm257, %v190, 0
      %v277 = vsel %vm257, %v192, 0
      %v280 = vsel %vm257, %v194, 0
      %v283 = vsel %vm257, %v196, 0
      %v286 = vsel %vm257, %v198, 0
      %v289 = vsel %vm257, %v200, 0
      %v292 = vsel %vm257, %v202, 0
      %v295 = vsel %vm257, %v204, 0
      %v298 = vsel %vm257, %v206, 0
      %v301 = vsel %vm257, %v208, 0
      %v304 = vsel %vm257, %v210, 0
      %vm306 = vcmask 1041408
      %v308 = vsel %vm306, %v243, 0
      %v311 = vsel %vm306, %v244, 0
      %313 = vmatprep.subr.mxu0 %v242
      %314 = vmatpush1.msra.mxu0 %v241
      %315 = vmatprep.subr.mxu0 %v240
      %316 = vmatpush1.msra.mxu0 %v239
      %317 = vmatprep.subr.mxu0 %v238
      %318 = vmatpush1.msra.mxu0 %v237
      %319 = vmatprep.subr.mxu0 %v236
      %320 = vmatpush1.msra.mxu0 %v235
      %321 = vmatprep.subr.mxu0 %v234
      %322 = vmatpush1.msra.mxu0 %v233
      %323 = vmatprep.subr.mxu0 %v232
      %324 = vmatpush1.msra.mxu0 %v231
      %325 = vmatprep.subr.mxu0 %v230
      %326 = vmatpush1.msra.mxu0 %v229
      %327 = vmatprep.subr.mxu0 %v228
      %328 = vmatpush1.msra.mxu0 %v227
      %329 = vmatprep.subr.mxu0 %v226
      %330 = vmatpush1.msra.mxu0 %v225
      %331 = vmatprep.subr.mxu0 %v224
      %332 = vmatpush1.msra.mxu0 %v223
      %333 = vmatprep.subr.mxu0 %v222
      %334 = vmatpush1.msra.mxu0 %v221
      %335 = vmatprep.subr.mxu0 %v220
      %336 = vmatpush1.msra.mxu0 %v219
      %337 = vmatprep.subr.mxu0 %v218
      %338 = vmatpush1.msra.mxu0 %v217
      %339 = vmatprep.subr.mxu0 %v216
      %340 = vmatpush1.msra.mxu0 %v215
      %341 = vmatprep.subr.mxu0 %v214
      %342 = vmatpush1.msra.mxu0 %v213
      %343 = vmatprep.subr.mxu0 %v212
      %344 = vmatpush1.msra.mxu0 %v211
      %345 = vmatprep.subr.mxu0 0.0
      %346 = vmatpush2.msra.mxu0 0.0
      %347 = vmatprep.subr.mxu0 0.0
      %348 = vmatpush2.msra.mxu0 0.0
      %349 = vmatprep.subr.mxu0 0.0
      %350 = vmatpush2.msra.mxu0 0.0
      %351 = vmatprep.subr.mxu0 0.0
      %352 = vmatpush2.msra.mxu0 0.0
      %353 = vmatprep.subr.mxu0 0.0
      %354 = vmatpush2.msra.mxu0 0.0
      %355 = vmatprep.subr.mxu0 0.0
      %356 = vmatpush2.msra.mxu0 0.0
      %357 = vmatprep.subr.mxu0 0.0
      %358 = vmatpush2.msra.mxu0 0.0
      %359 = vmatprep.subr.mxu0 0.0
      %360 = vmatpush2.msra.mxu0 0.0
      %361 = vmatprep.subr.mxu0 0.0
      %362 = vmatpush2.msra.mxu0 0.0
      %363 = vmatprep.subr.mxu0 0.0
      %364 = vmatpush2.msra.mxu0 0.0
      %365 = vmatprep.subr.mxu0 0.0
      %366 = vmatpush2.msra.mxu0 0.0
      %367 = vmatprep.subr.mxu0 0.0
      %368 = vmatpush2.msra.mxu0 0.0
      %369 = vmatprep.subr.mxu0 0.0
      %370 = vmatpush2.msra.mxu0 0.0
      %371 = vmatprep.subr.mxu0 0.0
      %372 = vmatpush2.msra.mxu0 0.0
      %373 = vmatprep.subr.mxu0 0.0
      %374 = vmatpush2.msra.mxu0 0.0
      %375 = vmatprep.subr.mxu0 %v311
      %376 = vmatpush2.msra.mxu0 %v308
      %377 = vmatprep.mubr.f32.mxu0 %v259
      %378 = vmatmul.mubr.f32.gmra.mxu0 %v179
      %v379 = vpop.f32.mrf.mxu0
      %v380 = vadd.f32 %v250, %v379
      %v381 = vpop.f32.mrf.mxu0
      %v382 = vadd.f32 %v254, %v381
      %383 = vmatprep.mubr.f32.mxu0 %v262
      %384 = vmatmul.mubr.f32.gmra.mxu0 %v181
      %v385 = vpop.f32.mrf.mxu0
      %v386 = vadd.f32 %v250, %v385
      %v387 = vpop.f32.mrf.mxu0
      %v388 = vadd.f32 %v254, %v387
      %389 = vmatprep.mubr.f32.mxu0 %v265
      %390 = vmatmul.mubr.f32.gmra.mxu0 %v183
      %v391 = vpop.f32.mrf.mxu0
      %v392 = vadd.f32 %v250, %v391
      %v393 = vpop.f32.mrf.mxu0
      %v394 = vadd.f32 %v254, %v393
      %395 = vmatprep.mubr.f32.mxu0 %v268
      %396 = vmatmul.mubr.f32.gmra.mxu0 %v185
      %v397 = vpop.f32.mrf.mxu0
      %v398 = vadd.f32 %v250, %v397
      %v399 = vpop.f32.mrf.mxu0
      %v400 = vadd.f32 %v254, %v399
      %401 = vmatprep.mubr.f32.mxu0 %v271
      %402 = vmatmul.mubr.f32.gmra.mxu0 %v187
      %v403 = vpop.f32.mrf.mxu0
      %v404 = vadd.f32 %v250, %v403
      %v405 = vpop.f32.mrf.mxu0
      %v406 = vadd.f32 %v254, %v405
      %407 = vmatprep.mubr.f32.mxu0 %v274
      %408 = vmatmul.mubr.f32.gmra.mxu0 %v189
      %v409 = vpop.f32.mrf.mxu0
      %v410 = vadd.f32 %v250, %v409
      %v411 = vpop.f32.mrf.mxu0
      %v412 = vadd.f32 %v254, %v411
      %413 = vmatprep.mubr.f32.mxu0 %v277
      %414 = vmatmul.mubr.f32.gmra.mxu0 %v191
      %v415 = vpop.f32.mrf.mxu0
      %v416 = vadd.f32 %v250, %v415
      %v417 = vpop.f32.mrf.mxu0
      %v418 = vadd.f32 %v254, %v417
      %419 = vmatprep.mubr.f32.mxu0 %v280
      %420 = vmatmul.mubr.f32.gmra.mxu0 %v193
      %v421 = vpop.f32.mrf.mxu0
      %v422 = vadd.f32 %v250, %v421
      %v423 = vpop.f32.mrf.mxu0
      %v424 = vadd.f32 %v254, %v423
      %425 = vmatprep.mubr.f32.mxu0 %v283
      %426 = vmatmul.mubr.f32.gmra.mxu0 %v195
      %v427 = vpop.f32.mrf.mxu0
      %v428 = vadd.f32 %v250, %v427
      %v429 = vpop.f32.mrf.mxu0
      %v430 = vadd.f32 %v254, %v429
      %431 = vmatprep.mubr.f32.mxu0 %v286
      %432 = vmatmul.mubr.f32.gmra.mxu0 %v197
      %v433 = vpop.f32.mrf.mxu0
      %v434 = vadd.f32 %v250, %v433
      %v435 = vpop.f32.mrf.mxu0
      %v436 = vadd.f32 %v254, %v435
      %437 = vmatprep.mubr.f32.mxu0 %v289
      %438 = vmatmul.mubr.f32.gmra.mxu0 %v199
      %v439 = vpop.f32.mrf.mxu0
      %v440 = vadd.f32 %v250, %v439
      %v441 = vpop.f32.mrf.mxu0
      %v442 = vadd.f32 %v254, %v441
      %443 = vmatprep.mubr.f32.mxu0 %v292
      %444 = vmatmul.mubr.f32.gmra.mxu0 %v201
      %v445 = vpop.f32.mrf.mxu0
      %v446 = vadd.f32 %v250, %v445
      %v447 = vpop.f32.mrf.mxu0
      %v448 = vadd.f32 %v254, %v447
      %449 = vmatprep.mubr.f32.mxu0 %v295
      %450 = vmatmul.mubr.f32.gmra.mxu0 %v203
      %v451 = vpop.f32.mrf.mxu0
      %v452 = vadd.f32 %v250, %v451
      %v453 = vpop.f32.mrf.mxu0
      %v454 = vadd.f32 %v254, %v453
      %455 = vmatprep.mubr.f32.mxu0 %v298
      %456 = vmatmul.mubr.f32.gmra.mxu0 %v205
      %v457 = vpop.f32.mrf.mxu0
      %v458 = vadd.f32 %v250, %v457
      %v459 = vpop.f32.mrf.mxu0
      %v460 = vadd.f32 %v254, %v459
      %461 = vmatprep.mubr.f32.mxu0 %v301
      %462 = vmatmul.mubr.f32.gmra.mxu0 %v207
      %v463 = vpop.f32.mrf.mxu0
      %v464 = vadd.f32 %v250, %v463
      %v465 = vpop.f32.mrf.mxu0
      %v466 = vadd.f32 %v254, %v465
      %467 = vmatprep.mubr.f32.mxu0 %v304
      %468 = vmatmul.mubr.f32.gmra.mxu0 %v209
      %v469 = vpop.f32.mrf.mxu0
      %v470 = vadd.f32 %v250, %v469
      %v471 = vpop.f32.mrf.mxu0
      %v472 = vadd.f32 %v254, %v471
      %473 = vdwg.mxu0
      %474 = vst [vmem:[%s177] sm:$0xff] %v380
      %475 = vst.msk [vmem:[%s177 + $0x8] sm:$0xff] %vm257, %v382
      %476 = vst [vmem:[%s177 + $0x10] sm:$0xff] %v386
      %477 = vst.msk [vmem:[%s177 + $0x18] sm:$0xff] %vm257, %v388
      %478 = vst [vmem:[%s177 + $0x20] sm:$0xff] %v392
      %479 = vst.msk [vmem:[%s177 + $0x28] sm:$0xff] %vm257, %v394
      %480 = vst [vmem:[%s177 + $0x30] sm:$0xff] %v398
      %481 = vst.msk [vmem:[%s177 + $0x38] sm:$0xff] %vm257, %v400
      %482 = vst [vmem:[%s177 + $0x40] sm:$0xff] %v404
      %483 = vst.msk [vmem:[%s177 + $0x48] sm:$0xff] %vm257, %v406
      %484 = vst [vmem:[%s177 + $0x50] sm:$0xff] %v410
      %485 = vst.msk [vmem:[%s177 + $0x58] sm:$0xff] %vm257, %v412
      %486 = vst [vmem:[%s177 + $0x60] sm:$0xff] %v416
      %487 = vst.msk [vmem:[%s177 + $0x68] sm:$0xff] %vm257, %v418
      %488 = vst [vmem:[%s177 + $0x70] sm:$0xff] %v422
      %489 = vst.msk [vmem:[%s177 + $0x78] sm:$0xff] %vm257, %v424
      %490 = vst [vmem:[%s177 + $0x80] sm:$0xff] %v428
      %491 = vst.msk [vmem:[%s177 + $0x88] sm:$0xff] %vm257, %v430
      %492 = vst [vmem:[%s177 + $0x90] sm:$0xff] %v434
      %493 = vst.msk [vmem:[%s177 + $0x98] sm:$0xff] %vm257, %v436
      %494 = vst [vmem:[%s177 + $0xa0] sm:$0xff] %v440
      %495 = vst.msk [vmem:[%s177 + $0xa8] sm:$0xff] %vm257, %v442
      %496 = vst [vmem:[%s177 + $0xb0] sm:$0xff] %v446
      %497 = vst.msk [vmem:[%s177 + $0xb8] sm:$0xff] %vm257, %v448
      %498 = vst [vmem:[%s177 + $0xc0] sm:$0xff] %v452
      %499 = vst.msk [vmem:[%s177 + $0xc8] sm:$0xff] %vm257, %v454
      %500 = vst [vmem:[%s177 + $0xd0] sm:$0xff] %v458
      %501 = vst.msk [vmem:[%s177 + $0xd8] sm:$0xff] %vm257, %v460
      %502 = vst [vmem:[%s177 + $0xe0] sm:$0xff] %v464
      %503 = vst.msk [vmem:[%s177 + $0xe8] sm:$0xff] %vm257, %v466
      %504 = vst [vmem:[%s177 + $0xf0] sm:$0xff] %v470
      %505 = vst.msk [vmem:[%s177 + $0xf8] sm:$0xff] %vm257, %v472
      %506 = vst.msk [vmem:[%s177] sm:$0xff] %vm257, %v179
      %507 = vst.msk [vmem:[%s177 + $0x10] sm:$0xff] %vm257, %v181
      %508 = vst.msk [vmem:[%s177 + $0x20] sm:$0xff] %vm257, %v183
      %509 = vst.msk [vmem:[%s177 + $0x30] sm:$0xff] %vm257, %v185
      %510 = vst.msk [vmem:[%s177 + $0x40] sm:$0xff] %vm257, %v187
      %511 = vst.msk [vmem:[%s177 + $0x50] sm:$0xff] %vm257, %v189
      %512 = vst.msk [vmem:[%s177 + $0x60] sm:$0xff] %vm257, %v191
      %513 = vst.msk [vmem:[%s177 + $0x70] sm:$0xff] %vm257, %v193
      %514 = vst.msk [vmem:[%s177 + $0x80] sm:$0xff] %vm257, %v195
      %515 = vst.msk [vmem:[%s177 + $0x90] sm:$0xff] %vm257, %v197
      %516 = vst.msk [vmem:[%s177 + $0xa0] sm:$0xff] %vm257, %v199
      %517 = vst.msk [vmem:[%s177 + $0xb0] sm:$0xff] %vm257, %v201
      %518 = vst.msk [vmem:[%s177 + $0xc0] sm:$0xff] %vm257, %v203
      %519 = vst.msk [vmem:[%s177 + $0xd0] sm:$0xff] %vm257, %v205
      %520 = vst.msk [vmem:[%s177 + $0xe0] sm:$0xff] %vm257, %v207
      %521 = vst.msk [vmem:[%s177 + $0xf0] sm:$0xff] %vm257, %v209
      %s522 = smul.u32 16, %s14
      %p523 = scmp.lt.s32.totalorder %s522, 31
      %s524 = scalar_select %p523, %s522, 31
      %s525 = smul.addr %s524, 2
      %s526 = smul.addr %s525, 8
      %s527 = scalar_lea.vmem %s3, %s526
      // Predicated region
      $region33: #{ego_encoder.1} parent=31 // pred_check
        %p528 = pneg %p100
      $region34: #{ego_encoder.1} parent=31 // pred_check_branch
        %530 = sbr.rel (%p528) target = $region36
      $region35: #{ego_encoder.1} parent=31 // pred_region
        %s531 = smul.u32 16, %s14
      $region36: #{ego_encoder.1} parent=31 // pred_fallthru
        _
    $region32: #{ego_encoder.1} parent=5 // pred_fallthru
      _
    %p532 = scmp.le.s32.totalorder 2, %s9
    // Predicated region
    $region37: #{ego_encoder.1} parent=5 // pred_check
      %p533 = pneg %p532
    $region38: #{ego_encoder.1} parent=5 // pred_check_branch
      %535 = sbr.rel (%p533) target = $region40
    $region39: #{ego_encoder.1} parent=5 // pred_region
      %s536 = ssub.s32 %s9, 2
      // Predicated region
      $region41: #{ego_encoder.1} parent=39 // pred_check
        %p537 = pneg %p106
      $region42: #{ego_encoder.1} parent=39 // pred_check_branch
        %539 = sbr.rel (%p537) target = $region44
      $region43: #{ego_encoder.1} parent=39 // pred_region
        %s540 = smul.u32 16, %s15
        %p541 = scmp.lt.s32.totalorder %s540, 31
        %s542 = scalar_select %p541, %s540, 31
        %s543 = smul.addr %s542, 2
        %s544 = smul.addr %s543, 8
        %s545 = scalar_lea.vmem %s3, %s544
      $region44: #{ego_encoder.1} parent=39 // pred_fallthru
        _
    $region40: #{ego_encoder.1} parent=5 // pred_fallthru
      _
  $region6: #{ego_encoder.1} parent=0 // loop_footer
    %s13 = sadd.s32 1, %s9
  $region7: #{ego_encoder.1} parent=0 // loop_footer_branch
    %8 = sbr.rel target = $region3
  $region8: #{ego_encoder.1} parent=0 // loop_exit
    _

</llo_original>
